<compile_context>
chip_gen: v6e
topology: v6e:2x2x1
jax: 0.10.0
libtpu: 0.0.40
codegen_flags: <defaults>
</compile_context>

<pallas_src>
import functools
import numpy as np

import jax
import jax.numpy as jnp
from jax.experimental import pallas as pl
from jax.experimental.pallas import tpu as pltpu


# ----------------------------------------------------------------------------
# Kernel
# ----------------------------------------------------------------------------
def _fc(x, w_ref, b_ref, activation):
    """One FullyConnectedLayer. w_ref is pre-transposed [in, out] with the
    1/sqrt(in) gain already folded in; b_ref is [1, out] f32."""
    y = jnp.dot(x.astype(w_ref.dtype), w_ref[...],
                preferred_element_type=jnp.float32)
    y = y + b_ref[...].astype(jnp.float32)
    if activation == "lrelu":
        y = jnp.maximum(y, 0.2 * y) * np.float32(np.sqrt(2.0))
    return y


def latent_mapper_kernel(n_layer, res_indices, *refs):
    """refs = (z_ref, w0, b0, ..., w_{n-1}, b_{n-1}, res_w..., res_b..., out_ref)."""
    z_ref = refs[0]
    main = refs[1: 1 + 2 * n_layer]
    res = refs[1 + 2 * n_layer: -1]
    out_ref = refs[-1]

    res_params = {idx: (res[2 * k], res[2 * k + 1])
                  for k, idx in enumerate(res_indices)}

    z = z_ref[...].astype(jnp.float32)

    # normalize_2nd_moment over the channel axis (axis=1), per row -> batch-tiling safe.
    z = z * jax.lax.rsqrt(jnp.mean(z * z, axis=1, keepdims=True) + np.float32(1e-8))

    z_skip = None
    if n_layer > 2:
        z_skip = _fc(z, *res_params[0], activation="linear")

    for i in range(n_layer):
        if i % 2 == 0 and i > 0:
            z = z + z_skip * np.float32(np.sqrt(0.5))
            if i + 2 < n_layer:
                z_skip = _fc(z, *res_params[i], activation="linear")
        z = _fc(z, main[2 * i], main[2 * i + 1], activation="lrelu")

    out_ref[...] = z.astype(out_ref.dtype)


# ----------------------------------------------------------------------------
# Host-side parameter prep (layout plumbing, one time)
# ----------------------------------------------------------------------------
def _layer_names(n_layer):
    names = [f"fromZ{i}" for i in range(n_layer)]
    names += [f"res{i}" for i in range(n_layer) if i % 2 == 0 and i + 2 < n_layer]
    return names


def prepare_latent_mapper_params(params, *, n_layer, weight_dtype=jnp.bfloat16):
    """Pre-transpose weights to [in, out], fold in the 1/sqrt(in) gain, cast to
    weight_dtype. Biases stay f32."""
    prepped = {}
    for name in _layer_names(n_layer):
        w = params[f"{name}_w"]                                   # [out, in] f32
        g = np.float32(1.0 / np.sqrt(w.shape[1]))
        prepped[f"{name}_w"] = (w * g).T.astype(weight_dtype)     # [in, out]
        prepped[f"{name}_b"] = params[f"{name}_b"].astype(jnp.float32)
    return prepped


# ----------------------------------------------------------------------------
# Wrapper
# ----------------------------------------------------------------------------
def latent_mapper_forward(z, params, *, n_layer, out_dim,
                          weight_dtype=jnp.bfloat16, block_rows=512):
    """z: [batch, z_channels] f32. params: raw module-layout params (see init)."""
    batch, z_channels = z.shape
    res_indices = tuple(i for i in range(n_layer) if i % 2 == 0 and i + 2 < n_layer)

    prepped = prepare_latent_mapper_params(params, n_layer=n_layer,
                                           weight_dtype=weight_dtype)

    args = [z]
    for i in range(n_layer):
        args += [prepped[f"fromZ{i}_w"], prepped[f"fromZ{i}_b"]]
    for i in res_indices:
        args += [prepped[f"res{i}_w"], prepped[f"res{i}_b"]]

    # Batch tiling: z / out move per grid step, weights stay VMEM-resident.
    tm = batch if batch <= block_rows else block_rows
    grid = (pl.cdiv(batch, tm),)

    def resident_spec(a):
        # Same block index every grid step -> loaded once, kept in VMEM.
        return pl.BlockSpec(a.shape, lambda i, nd=a.ndim: (0,) * nd)

    in_specs = [pl.BlockSpec((tm, z_channels), lambda i: (i, 0))]
    in_specs += [resident_spec(a) for a in args[1:]]
    out_spec = pl.BlockSpec((tm, out_dim), lambda i: (i, 0))

    # Explicit VMEM budget: resident params (x2 for default double-buffering) plus
    # the pipelined activation tiles, clamped to the smallest physical VMEM (v7x 64 MiB).
    param_bytes = sum(int(np.prod(a.shape)) * a.dtype.itemsize for a in args[1:])
    act_bytes = tm * (z_channels + out_dim) * 4
    vmem_limit = int(min(64 << 20,
                         max(32 << 20, 2 * param_bytes + 4 * act_bytes + (2 << 20))))

    kernel = functools.partial(latent_mapper_kernel, n_layer, res_indices)

    return pl.pallas_call(
        kernel,
        grid=grid,
        in_specs=in_specs,
        out_specs=out_spec,
        out_shape=jax.ShapeDtypeStruct((batch, out_dim), jnp.float32),
        compiler_params=pltpu.CompilerParams(
            dimension_semantics=("parallel",),
            vmem_limit_bytes=vmem_limit,
        ),
    )(*args)


def init_latent_mapper_params(key, z_channels, out_dim, n_layer):
    """Synthetic init matching FullyConnectedLayer shapes: weight ~ N(0,1) [out, in],
    bias [1, out] (random here so the bias-add path is actually exercised)."""
    params = {}
    for i in range(n_layer):
        in_ch = z_channels if i == 0 else out_dim
        key, kw, kb = jax.random.split(key, 3)
        params[f"fromZ{i}_w"] = jax.random.normal(kw, (out_dim, in_ch), jnp.float32)
        params[f"fromZ{i}_b"] = 0.1 * jax.random.normal(kb, (1, out_dim), jnp.float32)
        if i % 2 == 0 and i + 2 < n_layer:
            key, kr, krb = jax.random.split(key, 3)
            params[f"res{i}_w"] = jax.random.normal(kr, (out_dim, in_ch), jnp.float32)
            params[f"res{i}_b"] = 0.1 * jax.random.normal(krb, (1, out_dim), jnp.float32)
    return params


# ----------------------------------------------------------------------------
# Pure-JAX references
# ----------------------------------------------------------------------------
def latent_mapper_reference_exact(z, params, *, n_layer):
    """Exact module semantics: raw [out, in] f32 weights, runtime gain, lrelu."""
    def fc(x, w, b, act):
        g = np.float32(1.0 / np.sqrt(w.shape[1]))
        y = x @ (w * g).T + b
        if act == "lrelu":
            y = jnp.where(y >= 0.0, y, 0.2 * y) * np.float32(np.sqrt(2.0))
        return y

    z = z * jax.lax.rsqrt(jnp.mean(z * z, axis=1, keepdims=True) + 1e-8)
    z_skip = None
    if n_layer > 2:
        z_skip = fc(z, params["res0_w"], params["res0_b"], "linear")
    for i in range(n_layer):
        if i % 2 == 0 and i > 0:
            z = z + z_skip * np.float32(np.sqrt(0.5))
            if i + 2 < n_layer:
                z_skip = fc(z, params[f"res{i}_w"], params[f"res{i}_b"], "linear")
        z = fc(z, params[f"fromZ{i}_w"], params[f"fromZ{i}_b"], "lrelu")
    return z


def latent_mapper_reference_prepped(z, prepped, *, n_layer):
    """Same math as the kernel, using the SAME prepped (transposed / gain-folded /
    possibly bf16) parameters -> tight tolerance check of the kernel itself."""
    def fc(x, w, b, act):
        y = jnp.dot(x.astype(w.dtype), w, preferred_element_type=jnp.float32) + b
        if act == "lrelu":
            y = jnp.maximum(y, 0.2 * y) * np.float32(np.sqrt(2.0))
        return y

    z = z * jax.lax.rsqrt(jnp.mean(z * z, axis=1, keepdims=True) + np.float32(1e-8))
    z_skip = None
    if n_layer > 2:
        z_skip = fc(z, prepped["res0_w"], prepped["res0_b"], "linear")
    for i in range(n_layer):
        if i % 2 == 0 and i > 0:
            z = z + z_skip * np.float32(np.sqrt(0.5))
            if i + 2 < n_layer:
                z_skip = fc(z, prepped[f"res{i}_w"], prepped[f"res{i}_b"], "linear")
        z = fc(z, prepped[f"fromZ{i}_w"], prepped[f"fromZ{i}_b"], "lrelu")
    return z


# ----------------------------------------------------------------------------
# Main
# ----------------------------------------------------------------------------
if __name__ == "__main__":
    batch = 8
    z_channels = 32
    out_dim = 128   # multiple of 128 -> lane-dense intermediates and stores

    key = jax.random.PRNGKey(0)
    key, kz = jax.random.split(key)
    z = jax.random.normal(kz, (batch, z_channels), jnp.float32)

    # --- Test 1: n_layer=2 (module default), f32 weights, exact module semantics ---
    key, kp2 = jax.random.split(key)
    params2 = init_latent_mapper_params(kp2, z_channels, out_dim, 2)
    out2 = latent_mapper_forward(z, params2, n_layer=2, out_dim=out_dim,
                                 weight_dtype=jnp.float32)
    out2 = jax.block_until_ready(out2)
    ref2 = latent_mapper_reference_exact(z, params2, n_layer=2)
    np.testing.assert_allclose(np.asarray(out2), np.asarray(ref2),
                               rtol=1e-4, atol=1e-4)

    # --- Test 2: n_layer=5 (exercises the residual skip path), f32 weights ---
    key, kp5 = jax.random.split(key)
    params5 = init_latent_mapper_params(kp5, z_channels, out_dim, 5)
    out5 = latent_mapper_forward(z, params5, n_layer=5, out_dim=out_dim,
                                 weight_dtype=jnp.float32)
    out5 = jax.block_until_ready(out5)
    ref5 = latent_mapper_reference_exact(z, params5, n_layer=5)
    np.testing.assert_allclose(np.asarray(out5), np.asarray(ref5),
                               rtol=1e-4, atol=1e-4)

    # --- Test 3: n_layer=5, bf16 weights (the fast-path config) ---
    out5_bf16 = latent_mapper_forward(z, params5, n_layer=5, out_dim=out_dim,
                                      weight_dtype=jnp.bfloat16)
    out5_bf16 = jax.block_until_ready(out5_bf16)
    prepped5 = prepare_latent_mapper_params(params5, n_layer=5,
                                            weight_dtype=jnp.bfloat16)
    ref5_bf16 = latent_mapper_reference_prepped(z, prepped5, n_layer=5)
    np.testing.assert_allclose(np.asarray(out5_bf16), np.asarray(ref5_bf16),
                               rtol=5e-4, atol=5e-4)

    print("KERNEL_OK")
</pallas_src>

<mosaic_0001>
module attributes {stable_mosaic.version = 11 : i64} {
  func.func @latent_mapper_kernel(%arg0: i32, %arg1: memref<8x32xf32, #tpu.memory_space<vmem>>, %arg2: memref<32x128xf32, #tpu.memory_space<vmem>>, %arg3: memref<1x128xf32, #tpu.memory_space<vmem>>, %arg4: memref<128x128xf32, #tpu.memory_space<vmem>>, %arg5: memref<1x128xf32, #tpu.memory_space<vmem>>, %arg6: memref<8x128xf32, #tpu.memory_space<vmem>>) attributes {dimension_semantics = [#tpu.dimension_semantics<parallel>], iteration_bounds = array<i64: 1>, scalar_prefetch = 0 : i64, scratch_operands = 0 : i64, tpu.core_type = #tpu.core_type<tc>, window_params = [{transform_indices = @transform_0, window_bounds = array<i64: 8, 32>}, {pipeline_mode = #tpu.pipeline_mode<synchronous>, transform_indices = @transform_1, window_bounds = array<i64: 32, 128>}, {pipeline_mode = #tpu.pipeline_mode<synchronous>, transform_indices = @transform_2, window_bounds = array<i64: 1, 128>}, {pipeline_mode = #tpu.pipeline_mode<synchronous>, transform_indices = @transform_3, window_bounds = array<i64: 128, 128>}, {pipeline_mode = #tpu.pipeline_mode<synchronous>, transform_indices = @transform_4, window_bounds = array<i64: 1, 128>}, {transform_indices = @transform_5, window_bounds = array<i64: 8, 128>}]} {
    %c0 = arith.constant 0 : index
    %c0_0 = arith.constant 0 : index
    %0 = vector.load %arg1[%c0, %c0_0] : memref<8x32xf32, #tpu.memory_space<vmem>>, vector<8x32xf32>
    %1 = arith.mulf %0, %0 : vector<8x32xf32>
    %cst = arith.constant dense<0.000000e+00> : vector<8xf32>
    %2 = vector.multi_reduction <add>, %1, %cst [1] : vector<8x32xf32> to vector<8xf32>
    %3 = vector.shape_cast %2 : vector<8xf32> to vector<8x1xf32>
    %cst_1 = arith.constant 3.200000e+01 : f32
    %4 = vector.broadcast %cst_1 : f32 to vector<8x1xf32>
    %5 = arith.divf %3, %4 : vector<8x1xf32>
    %cst_2 = arith.constant 9.99999993E-9 : f32
    %6 = vector.broadcast %cst_2 : f32 to vector<8x1xf32>
    %7 = arith.addf %5, %6 : vector<8x1xf32>
    %8 = math.rsqrt %7 : vector<8x1xf32>
    %9 = vector.broadcast %8 : vector<8x1xf32> to vector<8x32xf32>
    %10 = arith.mulf %0, %9 : vector<8x32xf32>
    %c0_3 = arith.constant 0 : index
    %c0_4 = arith.constant 0 : index
    %11 = vector.load %arg2[%c0_3, %c0_4] : memref<32x128xf32, #tpu.memory_space<vmem>>, vector<32x128xf32>
    %cst_5 = arith.constant dense<0.000000e+00> : vector<8x128xf32>
    %12 = tpu.matmul %10, %11, %cst_5 {dimension_numbers = #tpu.dot_dimension_numbers<[1], [0], [0], [1], [0, 0, 1, 1], [], []>} : vector<8x32xf32>, vector<32x128xf32>, vector<8x128xf32> -> vector<8x128xf32>
    %c0_6 = arith.constant 0 : index
    %c0_7 = arith.constant 0 : index
    %13 = vector.load %arg3[%c0_6, %c0_7] : memref<1x128xf32, #tpu.memory_space<vmem>>, vector<1x128xf32>
    %14 = vector.broadcast %13 : vector<1x128xf32> to vector<8x128xf32>
    %15 = arith.addf %12, %14 : vector<8x128xf32>
    %cst_8 = arith.constant 2.000000e-01 : f32
    %16 = vector.broadcast %cst_8 : f32 to vector<8x128xf32>
    %17 = arith.mulf %16, %15 : vector<8x128xf32>
    %18 = arith.maximumf %15, %17 : vector<8x128xf32>
    %cst_9 = arith.constant 1.41421354 : f32
    %19 = vector.broadcast %cst_9 : f32 to vector<8x128xf32>
    %20 = arith.mulf %18, %19 : vector<8x128xf32>
    %c0_10 = arith.constant 0 : index
    %c0_11 = arith.constant 0 : index
    %21 = vector.load %arg4[%c0_10, %c0_11] : memref<128x128xf32, #tpu.memory_space<vmem>>, vector<128x128xf32>
    %cst_12 = arith.constant dense<0.000000e+00> : vector<8x128xf32>
    %22 = tpu.matmul %20, %21, %cst_12 {dimension_numbers = #tpu.dot_dimension_numbers<[1], [0], [0], [1], [0, 0, 1, 1], [], []>} : vector<8x128xf32>, vector<128x128xf32>, vector<8x128xf32> -> vector<8x128xf32>
    %c0_13 = arith.constant 0 : index
    %c0_14 = arith.constant 0 : index
    %23 = vector.load %arg5[%c0_13, %c0_14] : memref<1x128xf32, #tpu.memory_space<vmem>>, vector<1x128xf32>
    %24 = vector.broadcast %23 : vector<1x128xf32> to vector<8x128xf32>
    %25 = arith.addf %22, %24 : vector<8x128xf32>
    %cst_15 = arith.constant 2.000000e-01 : f32
    %26 = vector.broadcast %cst_15 : f32 to vector<8x128xf32>
    %27 = arith.mulf %26, %25 : vector<8x128xf32>
    %28 = arith.maximumf %25, %27 : vector<8x128xf32>
    %cst_16 = arith.constant 1.41421354 : f32
    %29 = vector.broadcast %cst_16 : f32 to vector<8x128xf32>
    %30 = arith.mulf %28, %29 : vector<8x128xf32>
    %c0_17 = arith.constant 0 : index
    %c0_18 = arith.constant 0 : index
    %31 = vector.load %arg6[%c0_17, %c0_18] : memref<8x128xf32, #tpu.memory_space<vmem>>, vector<8x128xf32>
    tpu.vector_store %arg6[%c0_17, %c0_18], %30 {strides = array<i32>} : memref<8x128xf32, #tpu.memory_space<vmem>>, vector<8x128xf32>,
    return
  }
  func.func @transform_0(%arg0: i32) -> (i32, i32) {
    %c0_i32 = arith.constant 0 : i32
    %c0_i32_0 = arith.constant 0 : i32
    return %arg0, %c0_i32 : i32, i32
  }
  func.func @transform_1(%arg0: i32) -> (i32, i32) {
    %c0_i32 = arith.constant 0 : i32
    %c0_i32_0 = arith.constant 0 : i32
    %c0_i32_1 = arith.constant 0 : i32
    return %c0_i32, %c0_i32_0 : i32, i32
  }
  func.func @transform_2(%arg0: i32) -> (i32, i32) {
    %c0_i32 = arith.constant 0 : i32
    %c0_i32_0 = arith.constant 0 : i32
    %c0_i32_1 = arith.constant 0 : i32
    return %c0_i32, %c0_i32_0 : i32, i32
  }
  func.func @transform_3(%arg0: i32) -> (i32, i32) {
    %c0_i32 = arith.constant 0 : i32
    %c0_i32_0 = arith.constant 0 : i32
    %c0_i32_1 = arith.constant 0 : i32
    return %c0_i32, %c0_i32_0 : i32, i32
  }
  func.func @transform_4(%arg0: i32) -> (i32, i32) {
    %c0_i32 = arith.constant 0 : i32
    %c0_i32_0 = arith.constant 0 : i32
    %c0_i32_1 = arith.constant 0 : i32
    return %c0_i32, %c0_i32_0 : i32, i32
  }
  func.func @transform_5(%arg0: i32) -> (i32, i32) {
    %c0_i32 = arith.constant 0 : i32
    %c0_i32_0 = arith.constant 0 : i32
    return %arg0, %c0_i32 : i32, i32
  }
}

</mosaic_0001>

<llo_original>
// kernel: tpu_custom_call.1
$region0: #{tpu_custom_call.1}
  #allocation0 [shape = 'u32[]', space=smem, size = 0x4, offset = 0x4, fixed_abs, tag = 'smem constant byte address 0x4 - core index']
  #allocation1 [shape = 'u32[144,128]{1,0:T(1,128)}', space=vmem, size = 0x12000, scoped, tag = 'internal scratch']
  %s0 = inlined_call_operand.hbm [shape: f32[8,32], index: 0, kind: input, shape index: {}]
  %s1 = inlined_call_operand.hbm [shape: f32[32,128], index: 1, kind: input, shape index: {}]
  %s2 = inlined_call_operand.vmem [shape: f32[1,128], index: 2, kind: input, shape index: {}]
  %s3 = inlined_call_operand.hbm [shape: f32[128,128], index: 3, kind: input, shape index: {}]
  %s4 = inlined_call_operand.vmem [shape: f32[1,128], index: 4, kind: input, shape index: {}]
  %s5 = inlined_call_operand.hbm [shape: f32[8,128], index: 5, kind: output, shape index: {}]
  %s6 = sld [smem:[#allocation0]]
  $region42: #{tpu_custom_call.1} parent=0
    _
  %s8 = ssub.s32 1, %s6
  %s9 = scalar_select 0, %s8, %s6
  $region1: #{tpu_custom_call.1} parent=0
    #allocation2 [shape = 'u8[4096]{0}', space=vmem, size = 0x1000, scoped, tag = 'input window, operand 0, single buffered']
    #allocation3 [shape = 's32[1]{0}', space=sflag, size = 0x4, scoped, tag = 'scoped memory for tpu_custom_call.1']
    #allocation4 [shape = 's32[1]{0}', space=sflag, size = 0x4, scoped, tag = 'scoped memory for tpu_custom_call.1']
    #allocation5 [shape = 'u8[16384]{0}', space=vmem, size = 0x4000, scoped, tag = 'input window, operand 1, single buffered']
    #allocation6 [shape = 's32[1]{0}', space=sflag, size = 0x4, scoped, tag = 'scoped memory for tpu_custom_call.1']
    #allocation7 [shape = 'u8[65536]{0}', space=vmem, size = 0x10000, scoped, tag = 'input window, operand 3, single buffered']
    #allocation8 [shape = 'u8[4096]{0}', space=vmem, size = 0x1000, scoped, tag = 'output window, operand 0, single buffered']
    %10 = vsyncpa [#allocation3], 0
    %11 = vsyncpa [#allocation6], 0
    %12 = vsyncpa [#allocation4], 0
    // Predicated region
    $region2: #{tpu_custom_call.1} parent=1 // pred_check
      _
    $region3: #{tpu_custom_call.1} parent=1 // pred_check_branch
      %14 = sbr.rel (0) target = $region5
    $region4: #{tpu_custom_call.1} parent=1 // pred_region
      %s16 = ssub.s32 128, 128
      %17 = vsyncadd [#allocation3], %s16
      %s19 = sshll.u32 [#allocation2], 4
      %s20 = int_to_ptr.vmem [resolvable:$true] %s19
      %22 = dma.hbm_to_vmem [thread:$0]  %s0, 128, %s20, [#allocation3]
    $region5: #{tpu_custom_call.1} parent=1 // pred_fallthru
      _
    // Predicated region
    $region6: #{tpu_custom_call.1} parent=1 // pred_check
      _
    $region7: #{tpu_custom_call.1} parent=1 // pred_check_branch
      %24 = sbr.rel (0) target = $region9
    $region8: #{tpu_custom_call.1} parent=1 // pred_region
      %s26 = ssub.s32 512, 512
      %27 = vsyncadd [#allocation6], %s26
      %s28 = sshll.u32 [#allocation5], 4
      %s29 = int_to_ptr.vmem [resolvable:$true] %s28
      %34 = dma.hbm_to_vmem [thread:$0]  %s1, 512, %s29, [#allocation6], 128, 128, 8
    $region9: #{tpu_custom_call.1} parent=1 // pred_fallthru
      _
    // Predicated region
    $region10: #{tpu_custom_call.1} parent=1 // pred_check
      _
    $region11: #{tpu_custom_call.1} parent=1 // pred_check_branch
      %36 = sbr.rel (0) target = $region13
    $region12: #{tpu_custom_call.1} parent=1 // pred_region
      _
    $region13: #{tpu_custom_call.1} parent=1 // pred_fallthru
      _
    // Predicated region
    $region14: #{tpu_custom_call.1} parent=1 // pred_check
      _
    $region15: #{tpu_custom_call.1} parent=1 // pred_check_branch
      %38 = sbr.rel (0) target = $region17
    $region16: #{tpu_custom_call.1} parent=1 // pred_region
      %s40 = ssub.s32 2048, 2048
      %41 = vsyncadd [#allocation6], %s40
      %s42 = sshll.u32 [#allocation7], 4
      %s43 = int_to_ptr.vmem [resolvable:$true] %s42
      %48 = dma.hbm_to_vmem [thread:$0]  %s3, 2048, %s43, [#allocation6], 128, 128, 8
    $region17: #{tpu_custom_call.1} parent=1 // pred_fallthru
      _
    // Predicated region
    $region18: #{tpu_custom_call.1} parent=1 // pred_check
      _
    $region19: #{tpu_custom_call.1} parent=1 // pred_check_branch
      %50 = sbr.rel (0) target = $region21
    $region20: #{tpu_custom_call.1} parent=1 // pred_region
      _
    $region21: #{tpu_custom_call.1} parent=1 // pred_fallthru
      _
    // Predicated region
    $region22: #{tpu_custom_call.1} parent=1 // pred_check
      _
    $region23: #{tpu_custom_call.1} parent=1 // pred_check_branch
      %52 = sbr.rel (0) target = $region25
    $region24: #{tpu_custom_call.1} parent=1 // pred_region
      %53 = dma.done [#allocation3], 128
    $region25: #{tpu_custom_call.1} parent=1 // pred_fallthru
      _
    // Predicated region
    $region26: #{tpu_custom_call.1} parent=1 // pred_check
      _
    $region27: #{tpu_custom_call.1} parent=1 // pred_check_branch
      %55 = sbr.rel (0) target = $region29
    $region28: #{tpu_custom_call.1} parent=1 // pred_region
      %56 = dma.done [#allocation6], 512
    $region29: #{tpu_custom_call.1} parent=1 // pred_fallthru
      _
    // Predicated region
    $region30: #{tpu_custom_call.1} parent=1 // pred_check
      _
    $region31: #{tpu_custom_call.1} parent=1 // pred_check_branch
      %58 = sbr.rel (0) target = $region33
    $region32: #{tpu_custom_call.1} parent=1 // pred_region
      %59 = dma.done [#allocation6], 2048
    $region33: #{tpu_custom_call.1} parent=1 // pred_fallthru
      _
    %v60 = vld [vmem:[#allocation2] sm:$0xff]
    %v61 = vmul.f32 %v60, %v60
    %vm62 = vcmask 261120
    %v63 = vsel %vm62, %v61, 0.0
    %64 = vadd.xlane.f32.xlu0 %v63
    %v65 = vpop.xlane.xlu0 %64
    %v66 = vrcp.pop 32.0
    %v67 = vmul.f32 %v65, %v66
    %v68 = vadd.f32 %v67, 1e-08
    %v69 = vrsqrt.pop %v68
    %v70 = vmul.f32 %v60, %v69
    %v71 = vld [vmem:[#allocation5] sm:$0xff]
    %v72 = vld [vmem:[#allocation5 + $0x8] sm:$0xff]
    %v73 = vld [vmem:[#allocation5 + $0x10] sm:$0xff]
    %v74 = vld [vmem:[#allocation5 + $0x18] sm:$0xff]
    %v75 = vld [vmem:[%s2] sm:$0x1]
    %v77 = vlaneseq
    %v78 = vshrl.u32 %v77, 7
    %v79 = vsub.s32 0, %v78
    %v80 = vrot.slane %v75, %v79
    %v83 = vsel %vm62, %v70, 0
    %85 = vmatprep.subr.mxu0 0.0
    %86 = vmatpush1.msra.mxu0 0.0
    %87 = vmatprep.subr.mxu0 0.0
    %88 = vmatpush1.msra.mxu0 0.0
    %89 = vmatprep.subr.mxu0 0.0
    %90 = vmatpush1.msra.mxu0 0.0
    %91 = vmatprep.subr.mxu0 0.0
    %92 = vmatpush1.msra.mxu0 0.0
    %93 = vmatprep.subr.mxu0 0.0
    %94 = vmatpush1.msra.mxu0 0.0
    %95 = vmatprep.subr.mxu0 0.0
    %96 = vmatpush1.msra.mxu0 0.0
    %97 = vmatprep.subr.mxu0 0.0
    %98 = vmatpush1.msra.mxu0 0.0
    %99 = vmatprep.subr.mxu0 0.0
    %100 = vmatpush1.msra.mxu0 0.0
    %101 = vmatprep.subr.mxu0 0.0
    %102 = vmatpush1.msra.mxu0 0.0
    %103 = vmatprep.subr.mxu0 0.0
    %104 = vmatpush1.msra.mxu0 0.0
    %105 = vmatprep.subr.mxu0 0.0
    %106 = vmatpush1.msra.mxu0 0.0
    %107 = vmatprep.subr.mxu0 0.0
    %108 = vmatpush1.msra.mxu0 0.0
    %109 = vmatprep.subr.mxu0 0.0
    %110 = vmatpush1.msra.mxu0 %v74
    %111 = vmatprep.subr.mxu0 0.0
    %112 = vmatpush1.msra.mxu0 %v73
    %113 = vmatprep.subr.mxu0 0.0
    %114 = vmatpush1.msra.mxu0 %v72
    %115 = vmatprep.subr.mxu0 0.0
    %116 = vmatpush1.msra.mxu0 %v71
    %117 = vmatprep.subr.mxu0 0.0
    %118 = vmatpush2.msra.mxu0 0.0
    %119 = vmatprep.subr.mxu0 0.0
    %120 = vmatpush2.msra.mxu0 0.0
    %121 = vmatprep.subr.mxu0 0.0
    %122 = vmatpush2.msra.mxu0 0.0
    %123 = vmatprep.subr.mxu0 0.0
    %124 = vmatpush2.msra.mxu0 0.0
    %125 = vmatprep.subr.mxu0 0.0
    %126 = vmatpush2.msra.mxu0 0.0
    %127 = vmatprep.subr.mxu0 0.0
    %128 = vmatpush2.msra.mxu0 0.0
    %129 = vmatprep.subr.mxu0 0.0
    %130 = vmatpush2.msra.mxu0 0.0
    %131 = vmatprep.subr.mxu0 0.0
    %132 = vmatpush2.msra.mxu0 0.0
    %133 = vmatprep.subr.mxu0 0.0
    %134 = vmatpush2.msra.mxu0 0.0
    %135 = vmatprep.subr.mxu0 0.0
    %136 = vmatpush2.msra.mxu0 0.0
    %137 = vmatprep.subr.mxu0 0.0
    %138 = vmatpush2.msra.mxu0 0.0
    %139 = vmatprep.subr.mxu0 0.0
    %140 = vmatpush2.msra.mxu0 0.0
    %141 = vmatprep.subr.mxu0 0.0
    %142 = vmatpush2.msra.mxu0 0.0
    %143 = vmatprep.subr.mxu0 0.0
    %144 = vmatpush2.msra.mxu0 0.0
    %145 = vmatprep.subr.mxu0 0.0
    %146 = vmatpush2.msra.mxu0 0.0
    %147 = vmatprep.subr.mxu0 0.0
    %148 = vmatpush2.msra.mxu0 0.0
    %149 = vmatprep.mubr.f32.mxu0 0.0
    %150 = vmatmul.mubr.f32.gmra.mxu0 %v83
    %v151 = vpop.f32.mrf.mxu0
    %v152 = vadd.f32 %v80, %v151
    %v153 = vpop.f32.mrf.mxu0
    %154 = vdwg.mxu0
    %v155 = vmul.f32 %v152, 0.2
    %v156 = vmax.f32 %v152, %v155
    %v157 = vmul.f32 %v156, 1.4142135
    %v158 = vld [vmem:[#allocation7] sm:$0xff]
    %v159 = vld [vmem:[#allocation7 + $0x8] sm:$0xff]
    %v160 = vld [vmem:[#allocation7 + $0x10] sm:$0xff]
    %v161 = vld [vmem:[#allocation7 + $0x18] sm:$0xff]
    %v162 = vld [vmem:[#allocation7 + $0x20] sm:$0xff]
    %v163 = vld [vmem:[#allocation7 + $0x28] sm:$0xff]
    %v164 = vld [vmem:[#allocation7 + $0x30] sm:$0xff]
    %v165 = vld [vmem:[#allocation7 + $0x38] sm:$0xff]
    %v166 = vld [vmem:[#allocation7 + $0x40] sm:$0xff]
    %v167 = vld [vmem:[#allocation7 + $0x48] sm:$0xff]
    %v168 = vld [vmem:[#allocation7 + $0x50] sm:$0xff]
    %v169 = vld [vmem:[#allocation7 + $0x58] sm:$0xff]
    %v170 = vld [vmem:[#allocation7 + $0x60] sm:$0xff]
    %v171 = vld [vmem:[#allocation7 + $0x68] sm:$0xff]
    %v172 = vld [vmem:[#allocation7 + $0x70] sm:$0xff]
    %v173 = vld [vmem:[#allocation7 + $0x78] sm:$0xff]
    %v174 = vld [vmem:[%s4] sm:$0x1]
    %v176 = vlaneseq
    %v177 = vshrl.u32 %v176, 7
    %v178 = vsub.s32 0, %v177
    %v179 = vrot.slane %v174, %v178
    %181 = vmatprep.subr.mxu0 0.0
    %182 = vmatpush1.msra.mxu0 %v173
    %183 = vmatprep.subr.mxu0 0.0
    %184 = vmatpush1.msra.mxu0 %v172
    %185 = vmatprep.subr.mxu0 0.0
    %186 = vmatpush1.msra.mxu0 %v171
    %187 = vmatprep.subr.mxu0 0.0
    %188 = vmatpush1.msra.mxu0 %v170
    %189 = vmatprep.subr.mxu0 0.0
    %190 = vmatpush1.msra.mxu0 %v169
    %191 = vmatprep.subr.mxu0 0.0
    %192 = vmatpush1.msra.mxu0 %v168
    %193 = vmatprep.subr.mxu0 0.0
    %194 = vmatpush1.msra.mxu0 %v167
    %195 = vmatprep.subr.mxu0 0.0
    %196 = vmatpush1.msra.mxu0 %v166
    %197 = vmatprep.subr.mxu0 0.0
    %198 = vmatpush1.msra.mxu0 %v165
    %199 = vmatprep.subr.mxu0 0.0
    %200 = vmatpush1.msra.mxu0 %v164
    %201 = vmatprep.subr.mxu0 0.0
    %202 = vmatpush1.msra.mxu0 %v163
    %203 = vmatprep.subr.mxu0 0.0
    %204 = vmatpush1.msra.mxu0 %v162
    %205 = vmatprep.subr.mxu0 0.0
    %206 = vmatpush1.msra.mxu0 %v161
    %207 = vmatprep.subr.mxu0 0.0
    %208 = vmatpush1.msra.mxu0 %v160
    %209 = vmatprep.subr.mxu0 0.0
    %210 = vmatpush1.msra.mxu0 %v159
    %211 = vmatprep.subr.mxu0 0.0
    %212 = vmatpush1.msra.mxu0 %v158
    %213 = vmatprep.subr.mxu0 0.0
    %214 = vmatpush2.msra.mxu0 0.0
    %215 = vmatprep.subr.mxu0 0.0
    %216 = vmatpush2.msra.mxu0 0.0
    %217 = vmatprep.subr.mxu0 0.0
    %218 = vmatpush2.msra.mxu0 0.0
    %219 = vmatprep.subr.mxu0 0.0
    %220 = vmatpush2.msra.mxu0 0.0
    %221 = vmatprep.subr.mxu0 0.0
    %222 = vmatpush2.msra.mxu0 0.0
    %223 = vmatprep.subr.mxu0 0.0
    %224 = vmatpush2.msra.mxu0 0.0
    %225 = vmatprep.subr.mxu0 0.0
    %226 = vmatpush2.msra.mxu0 0.0
    %227 = vmatprep.subr.mxu0 0.0
    %228 = vmatpush2.msra.mxu0 0.0
    %229 = vmatprep.subr.mxu0 0.0
    %230 = vmatpush2.msra.mxu0 0.0
    %231 = vmatprep.subr.mxu0 0.0
    %232 = vmatpush2.msra.mxu0 0.0
    %233 = vmatprep.subr.mxu0 0.0
    %234 = vmatpush2.msra.mxu0 0.0
    %235 = vmatprep.subr.mxu0 0.0
    %236 = vmatpush2.msra.mxu0 0.0
    %237 = vmatprep.subr.mxu0 0.0
    %238 = vmatpush2.msra.mxu0 0.0
    %239 = vmatprep.subr.mxu0 0.0
    %240 = vmatpush2.msra.mxu0 0.0
    %241 = vmatprep.subr.mxu0 0.0
    %242 = vmatpush2.msra.mxu0 0.0
    %243 = vmatprep.subr.mxu0 0.0
    %244 = vmatpush2.msra.mxu0 0.0
    %245 = vmatprep.mubr.f32.mxu0 0.0
    %246 = vmatmul.mubr.f32.gmra.mxu0 %v157
    %v247 = vpop.f32.mrf.mxu0
    %v248 = vadd.f32 %v179, %v247
    %v249 = vpop.f32.mrf.mxu0
    %250 = vdwg.mxu0
    %v251 = vmul.f32 %v248, 0.2
    %v252 = vmax.f32 %v248, %v251
    %v253 = vmul.f32 %v252, 1.4142135
    %254 = vst [vmem:[#allocation8] sm:$0xff] %v253
    // Predicated region
    $region34: #{tpu_custom_call.1} parent=1 // pred_check
      _
    $region35: #{tpu_custom_call.1} parent=1 // pred_check_branch
      %256 = sbr.rel (0) target = $region37
    $region36: #{tpu_custom_call.1} parent=1 // pred_region
      %s258 = ssub.s32 128, 128
      %259 = vsyncadd [#allocation4], %s258
      %s261 = sshll.u32 [#allocation8], 4
      %s262 = int_to_ptr.vmem [resolvable:$true] %s261
      %264 = dma.vmem_to_hbm [thread:$0]  %s262, 128, %s5, [#allocation4]
    $region37: #{tpu_custom_call.1} parent=1 // pred_fallthru
      _
    // Predicated region
    $region38: #{tpu_custom_call.1} parent=1 // pred_check
      _
    $region39: #{tpu_custom_call.1} parent=1 // pred_check_branch
      %266 = sbr.rel (0) target = $region41
    $region40: #{tpu_custom_call.1} parent=1 // pred_region
      %267 = dma.done [#allocation4], 128
    $region41: #{tpu_custom_call.1} parent=1 // pred_fallthru
      _
    %268 = vsyncpa [#allocation3], 1
    %269 = vsyncpa [#allocation6], 1
    %270 = vsyncpa [#allocation4], 1

</llo_original>
